<compile_context>
chip_gen: v7x
topology: tpu7x:2x2x1
jax: 0.10.0
libtpu: 0.0.40
codegen_flags: <defaults>
</compile_context>

<pallas_src>
import numpy as np
import jax
import jax.numpy as jnp
from jax.experimental import pallas as pl
from jax.experimental.pallas import tpu as pltpu

LANES = 128                 # lane width of a vreg
TARGET_BLOCK_ROWS = 256     # 256 sublane rows * 128 lanes = 32768 pixels/step


def _cdiv(a, b):
    return -(-a // b)


def _loss_kernel(sh_hat_ref, sh_gt_ref, p1_ref, p2_ref, d1_ref, d2_ref,
                 dirgt_ref, indgt_ref, out_ref):
    """One (batch, pixel-tile) block.

    Input refs are (C, R, 128) views (channel = outer non-vreg axis); the
    output ref is (6, 128): per-lane partial sums of the six loss terms for
    this tile.  The cheap cross-sublane reduce (axis=0) is amortised by the
    32768-pixel tile; the final cross-lane/tile/batch reduction happens in
    the wrapper.
    """
    f32 = jnp.float32

    # --- sh MSE (reduction='sum') -------------------------------------------
    diff = sh_hat_ref[...].astype(f32) - sh_gt_ref[...].astype(f32)
    sh_mse = jnp.sum(diff * diff, axis=(0, 1))[None, :]            # (1, 128)

    p1 = p1_ref[0].astype(f32)                                      # (R, 128)
    p2 = p2_ref[0].astype(f32)
    ind1 = indgt_ref[0].astype(f32)
    ind2 = indgt_ref[1].astype(f32)

    # --- BCE (reduction='sum'); PyTorch clamps each log term at -100 --------
    # Kept in the exact two-term form so soft (non-{0,1}) targets preserve
    # the module's semantics.  (If targets are guaranteed binary, the two
    # logs per pixel could be folded into one to halve EUP work.)
    def bce_partial(p, y):
        logp = jnp.maximum(jnp.log(p), -100.0)
        log1mp = jnp.maximum(jnp.log(1.0 - p), -100.0)
        return -jnp.sum(y * logp + (1.0 - y) * log1mp,
                        axis=0, keepdims=True)                      # (1, 128)

    d1_bce = bce_partial(p1, ind1)
    d2_bce = bce_partial(p2, ind2)

    d1 = d1_ref[...].astype(f32)           # (3, R, 128)
    d2 = d2_ref[...].astype(f32)           # (3, R, 128)
    dg = dirgt_ref[...].astype(f32)        # (6, R, 128)

    # --- dir losses: channel sums are 3 elementwise multiply-adds on dense
    # (R, 128) vregs (channel is the leading non-vreg axis -> pure VALU).
    cos1 = (d1[0] * dg[0] + d1[1] * dg[1] + d1[2] * dg[2]) * ind1
    dir1loss = -jnp.sum(jnp.abs(cos1), axis=0, keepdims=True)       # (1, 128)
    cos2 = (d2[0] * dg[3] + d2[1] * dg[4] + d2[2] * dg[5]) * ind2
    dir2loss = -jnp.sum(jnp.abs(cos2), axis=0, keepdims=True)

    # --- sepcos: |sum_c dir1_hat_c * (dir2_hat_c * ind2)| --------------------
    cos_sep = (d1[0] * d2[0] + d1[1] * d2[1] + d1[2] * d2[2]) * ind2
    seploss = jnp.sum(jnp.abs(cos_sep), axis=0, keepdims=True)

    out_ref[0:1, :] = sh_mse
    out_ref[1:2, :] = d1_bce
    out_ref[2:3, :] = d2_bce
    out_ref[3:4, :] = dir1loss
    out_ref[4:5, :] = dir2loss
    out_ref[5:6, :] = seploss


def patch_pred_loss(out, sh_gt, dir_gt, ind_gt, weight=None):
    """JAX/Pallas equivalent of PatchPredLoss.forward."""
    sh_hat, p1_hat, p2_hat, dir1_hat, dir2_hat = out
    if weight is None:
        weight = np.ones(6)   # module's deterministic default parameter

    B, _, H, W = sh_hat.shape
    hw = H * W

    rows = _cdiv(hw, LANES)
    if rows <= TARGET_BLOCK_ROWS:
        block_rows = rows          # single pixel tile (full-extent sublane dim)
        n_tiles = 1
    else:
        block_rows = TARGET_BLOCK_ROWS
        n_tiles = _cdiv(rows, block_rows)
        rows = n_tiles * block_rows
    hw_pad = rows * LANES

    def prep(x):
        # NCHW -> (B, C, rows, 128): trailing-dim reshape (+ zero pad of the
        # pixel tail) only; no transpose, no dtype change (cast happens
        # in-kernel, so bf16 inputs keep halved HBM traffic).
        b, c = int(x.shape[0]), int(x.shape[1])
        x = x.reshape(b, c, hw)
        if hw_pad != hw:
            x = jnp.pad(x, ((0, 0), (0, 0), (0, hw_pad - hw)))
        return x.reshape(b, c, rows, LANES)

    inputs = [prep(sh_hat), prep(sh_gt), prep(p1_hat), prep(p2_hat),
              prep(dir1_hat), prep(dir2_hat), prep(dir_gt), prep(ind_gt)]

    in_specs = [
        pl.BlockSpec((None, int(x.shape[1]), block_rows, LANES),
                     lambda b, i: (b, 0, i, 0))
        for x in inputs
    ]

    partials = pl.pallas_call(
        _loss_kernel,
        out_shape=jax.ShapeDtypeStruct((B, n_tiles, 6, LANES), jnp.float32),
        grid=(B, n_tiles),
        in_specs=in_specs,
        out_specs=pl.BlockSpec((None, None, 6, LANES),
                               lambda b, i: (b, i, 0, 0)),
        compiler_params=pltpu.CompilerParams(
            dimension_semantics=("parallel", "parallel")),
    )(*inputs)

    sums = jnp.sum(partials, axis=(0, 1, 3))           # (6,) scalar losses
    w = jnp.asarray(weight, dtype=jnp.float32)
    sh_mse, d1_bce, d2_bce, d1l, d2l, sepl = (sums[i] for i in range(6))
    total = (w[0] * sh_mse + w[1] * d1_bce + w[2] * d2_bce +
             w[3] * d1l + w[4] * d2l + w[5] * sepl)

    loss_dict = {
        'total': total,
        'sh_mse': sh_mse,
        'dir1_bce': d1_bce,
        'dir2_bce': d2_bce,
        'dir1_cos': d1l,
        'dir2_cos': d2l,
        'sep_cos': sepl,
    }
    return loss_dict, total


def _reference(out, sh_gt, dir_gt, ind_gt, weight):
    """Pure-JAX reference mirroring the PyTorch module (for verification)."""
    sh_hat, p1, p2, d1, d2 = out
    ind1 = ind_gt[:, 0:1]
    ind2 = ind_gt[:, 1:2]
    dir1_gt = dir_gt[:, 0:3]
    dir2_gt = dir_gt[:, 3:6]
    sh_mse = jnp.sum((sh_hat - sh_gt) ** 2)

    def bce(p, y):
        return -jnp.sum(y * jnp.maximum(jnp.log(p), -100.0) +
                        (1.0 - y) * jnp.maximum(jnp.log(1.0 - p), -100.0))

    d1_bce = bce(p1, ind1)
    d2_bce = bce(p2, ind2)
    d1l = -jnp.sum(jnp.abs(jnp.sum(d1 * ind1 * dir1_gt, axis=1)))
    d2l = -jnp.sum(jnp.abs(jnp.sum(d2 * ind2 * dir2_gt, axis=1)))
    sepl = jnp.sum(jnp.abs(jnp.sum(d1 * (d2 * ind2), axis=1)))
    w = weight
    return (w[0] * sh_mse + w[1] * d1_bce + w[2] * d2_bce +
            w[3] * d1l + w[4] * d2l + w[5] * sepl)


if __name__ == "__main__":
    key = jax.random.PRNGKey(0)
    B, C_SH, H, W = 2, 4, 16, 16
    keys = jax.random.split(key, 8)

    sh_hat = jax.random.normal(keys[0], (B, C_SH, H, W), jnp.float32)
    sh_gt = jax.random.normal(keys[1], (B, C_SH, H, W), jnp.float32)
    p1_hat = jax.nn.sigmoid(jax.random.normal(keys[2], (B, 1, H, W), jnp.float32))
    p2_hat = jax.nn.sigmoid(jax.random.normal(keys[3], (B, 1, H, W), jnp.float32))
    dir1_hat = jax.random.normal(keys[4], (B, 3, H, W), jnp.float32)
    dir2_hat = jax.random.normal(keys[5], (B, 3, H, W), jnp.float32)
    dir_gt = jax.random.normal(keys[6], (B, 6, H, W), jnp.float32)
    ind_gt = (jax.random.uniform(keys[7], (B, 2, H, W)) > 0.5).astype(jnp.float32)

    weight = np.ones(6)  # deterministic parameter (module default)
    out = (sh_hat, p1_hat, p2_hat, dir1_hat, dir2_hat)

    loss_dict, total = patch_pred_loss(out, sh_gt, dir_gt, ind_gt, weight)
    total = jax.block_until_ready(total)

    ref_total = _reference(out, sh_gt, dir_gt, ind_gt,
                           jnp.asarray(weight, jnp.float32))
    assert np.allclose(np.array(total), np.array(ref_total),
                       rtol=1e-4, atol=1e-3), (float(total), float(ref_total))

    print("KERNEL_OK")
</pallas_src>

<mosaic_0001>
module attributes {stable_mosaic.version = 11 : i64} {
  func.func @_loss_kernel(%arg0: i32, %arg1: i32, %arg2: memref<1x4x2x128xf32, #tpu.memory_space<vmem>>, %arg3: memref<1x4x2x128xf32, #tpu.memory_space<vmem>>, %arg4: memref<1x1x2x128xf32, #tpu.memory_space<vmem>>, %arg5: memref<1x1x2x128xf32, #tpu.memory_space<vmem>>, %arg6: memref<1x3x2x128xf32, #tpu.memory_space<vmem>>, %arg7: memref<1x3x2x128xf32, #tpu.memory_space<vmem>>, %arg8: memref<1x6x2x128xf32, #tpu.memory_space<vmem>>, %arg9: memref<1x2x2x128xf32, #tpu.memory_space<vmem>>, %arg10: memref<1x1x6x128xf32, #tpu.memory_space<vmem>>) attributes {dimension_semantics = [#tpu.dimension_semantics<parallel>, #tpu.dimension_semantics<parallel>], iteration_bounds = array<i64: 2, 1>, scalar_prefetch = 0 : i64, scratch_operands = 0 : i64, tpu.core_type = #tpu.core_type<tc>, window_params = [{transform_indices = @transform_0, window_bounds = array<i64: 1, 4, 2, 128>}, {transform_indices = @transform_1, window_bounds = array<i64: 1, 4, 2, 128>}, {transform_indices = @transform_2, window_bounds = array<i64: 1, 1, 2, 128>}, {transform_indices = @transform_3, window_bounds = array<i64: 1, 1, 2, 128>}, {transform_indices = @transform_4, window_bounds = array<i64: 1, 3, 2, 128>}, {transform_indices = @transform_5, window_bounds = array<i64: 1, 3, 2, 128>}, {transform_indices = @transform_6, window_bounds = array<i64: 1, 6, 2, 128>}, {transform_indices = @transform_7, window_bounds = array<i64: 1, 2, 2, 128>}, {transform_indices = @transform_8, window_bounds = array<i64: 1, 1, 6, 128>}]} {
    %c0 = arith.constant 0 : index
    %c0_0 = arith.constant 0 : index
    %c0_1 = arith.constant 0 : index
    %c0_2 = arith.constant 0 : index
    %0 = vector.load %arg2[%c0, %c0_0, %c0_1, %c0_2] : memref<1x4x2x128xf32, #tpu.memory_space<vmem>>, vector<1x4x2x128xf32>
    %1 = vector.shape_cast %0 : vector<1x4x2x128xf32> to vector<4x2x128xf32>
    %c0_3 = arith.constant 0 : index
    %c0_4 = arith.constant 0 : index
    %c0_5 = arith.constant 0 : index
    %c0_6 = arith.constant 0 : index
    %2 = vector.load %arg3[%c0_3, %c0_4, %c0_5, %c0_6] : memref<1x4x2x128xf32, #tpu.memory_space<vmem>>, vector<1x4x2x128xf32>
    %3 = vector.shape_cast %2 : vector<1x4x2x128xf32> to vector<4x2x128xf32>
    %4 = arith.subf %1, %3 : vector<4x2x128xf32>
    %5 = arith.mulf %4, %4 : vector<4x2x128xf32>
    %cst = arith.constant dense<0.000000e+00> : vector<128xf32>
    %6 = vector.multi_reduction <add>, %5, %cst [0, 1] : vector<4x2x128xf32> to vector<128xf32>
    %7 = vector.shape_cast %6 : vector<128xf32> to vector<1x128xf32>
    %c0_7 = arith.constant 0 : index
    %c0_8 = arith.constant 0 : index
    %c0_9 = arith.constant 0 : index
    %c0_10 = arith.constant 0 : index
    %8 = vector.load %arg4[%c0_7, %c0_8, %c0_9, %c0_10] : memref<1x1x2x128xf32, #tpu.memory_space<vmem>>, vector<1x1x2x128xf32>
    %9 = vector.shape_cast %8 : vector<1x1x2x128xf32> to vector<2x128xf32>
    %c0_11 = arith.constant 0 : index
    %c0_12 = arith.constant 0 : index
    %c0_13 = arith.constant 0 : index
    %c0_14 = arith.constant 0 : index
    %10 = vector.load %arg5[%c0_11, %c0_12, %c0_13, %c0_14] : memref<1x1x2x128xf32, #tpu.memory_space<vmem>>, vector<1x1x2x128xf32>
    %11 = vector.shape_cast %10 : vector<1x1x2x128xf32> to vector<2x128xf32>
    %c0_15 = arith.constant 0 : index
    %c0_16 = arith.constant 0 : index
    %c0_17 = arith.constant 0 : index
    %c0_18 = arith.constant 0 : index
    %12 = vector.load %arg9[%c0_15, %c0_16, %c0_17, %c0_18] : memref<1x2x2x128xf32, #tpu.memory_space<vmem>>, vector<1x1x2x128xf32>
    %13 = vector.shape_cast %12 : vector<1x1x2x128xf32> to vector<2x128xf32>
    %c0_19 = arith.constant 0 : index
    %c1 = arith.constant 1 : index
    %c0_20 = arith.constant 0 : index
    %c0_21 = arith.constant 0 : index
    %14 = vector.load %arg9[%c0_19, %c1, %c0_20, %c0_21] : memref<1x2x2x128xf32, #tpu.memory_space<vmem>>, vector<1x1x2x128xf32>
    %15 = vector.shape_cast %14 : vector<1x1x2x128xf32> to vector<2x128xf32>
    %16 = math.log %9 : vector<2x128xf32>
    %cst_22 = arith.constant -1.000000e+02 : f32
    %17 = vector.broadcast %cst_22 : f32 to vector<2x128xf32>
    %18 = arith.maximumf %16, %17 : vector<2x128xf32>
    %cst_23 = arith.constant 1.000000e+00 : f32
    %19 = vector.broadcast %cst_23 : f32 to vector<2x128xf32>
    %20 = arith.subf %19, %9 : vector<2x128xf32>
    %21 = math.log %20 : vector<2x128xf32>
    %cst_24 = arith.constant -1.000000e+02 : f32
    %22 = vector.broadcast %cst_24 : f32 to vector<2x128xf32>
    %23 = arith.maximumf %21, %22 : vector<2x128xf32>
    %24 = arith.mulf %13, %18 : vector<2x128xf32>
    %cst_25 = arith.constant 1.000000e+00 : f32
    %25 = vector.broadcast %cst_25 : f32 to vector<2x128xf32>
    %26 = arith.subf %25, %13 : vector<2x128xf32>
    %27 = arith.mulf %26, %23 : vector<2x128xf32>
    %28 = arith.addf %24, %27 : vector<2x128xf32>
    %cst_26 = arith.constant dense<0.000000e+00> : vector<128xf32>
    %29 = vector.multi_reduction <add>, %28, %cst_26 [0] : vector<2x128xf32> to vector<128xf32>
    %30 = vector.shape_cast %29 : vector<128xf32> to vector<1x128xf32>
    %cst_27 = arith.constant 0.000000e+00 : f32
    %31 = vector.broadcast %cst_27 : f32 to vector<1x128xf32>
    %32 = arith.subf %31, %30 : vector<1x128xf32>
    %33 = math.log %11 : vector<2x128xf32>
    %cst_28 = arith.constant -1.000000e+02 : f32
    %34 = vector.broadcast %cst_28 : f32 to vector<2x128xf32>
    %35 = arith.maximumf %33, %34 : vector<2x128xf32>
    %cst_29 = arith.constant 1.000000e+00 : f32
    %36 = vector.broadcast %cst_29 : f32 to vector<2x128xf32>
    %37 = arith.subf %36, %11 : vector<2x128xf32>
    %38 = math.log %37 : vector<2x128xf32>
    %cst_30 = arith.constant -1.000000e+02 : f32
    %39 = vector.broadcast %cst_30 : f32 to vector<2x128xf32>
    %40 = arith.maximumf %38, %39 : vector<2x128xf32>
    %41 = arith.mulf %15, %35 : vector<2x128xf32>
    %cst_31 = arith.constant 1.000000e+00 : f32
    %42 = vector.broadcast %cst_31 : f32 to vector<2x128xf32>
    %43 = arith.subf %42, %15 : vector<2x128xf32>
    %44 = arith.mulf %43, %40 : vector<2x128xf32>
    %45 = arith.addf %41, %44 : vector<2x128xf32>
    %cst_32 = arith.constant dense<0.000000e+00> : vector<128xf32>
    %46 = vector.multi_reduction <add>, %45, %cst_32 [0] : vector<2x128xf32> to vector<128xf32>
    %47 = vector.shape_cast %46 : vector<128xf32> to vector<1x128xf32>
    %cst_33 = arith.constant 0.000000e+00 : f32
    %48 = vector.broadcast %cst_33 : f32 to vector<1x128xf32>
    %49 = arith.subf %48, %47 : vector<1x128xf32>
    %c0_34 = arith.constant 0 : index
    %c0_35 = arith.constant 0 : index
    %c0_36 = arith.constant 0 : index
    %c0_37 = arith.constant 0 : index
    %50 = vector.load %arg6[%c0_34, %c0_35, %c0_36, %c0_37] : memref<1x3x2x128xf32, #tpu.memory_space<vmem>>, vector<1x3x2x128xf32>
    %51 = vector.shape_cast %50 : vector<1x3x2x128xf32> to vector<3x2x128xf32>
    %c0_38 = arith.constant 0 : index
    %c0_39 = arith.constant 0 : index
    %c0_40 = arith.constant 0 : index
    %c0_41 = arith.constant 0 : index
    %52 = vector.load %arg7[%c0_38, %c0_39, %c0_40, %c0_41] : memref<1x3x2x128xf32, #tpu.memory_space<vmem>>, vector<1x3x2x128xf32>
    %53 = vector.shape_cast %52 : vector<1x3x2x128xf32> to vector<3x2x128xf32>
    %c0_42 = arith.constant 0 : index
    %c0_43 = arith.constant 0 : index
    %c0_44 = arith.constant 0 : index
    %c0_45 = arith.constant 0 : index
    %54 = vector.load %arg8[%c0_42, %c0_43, %c0_44, %c0_45] : memref<1x6x2x128xf32, #tpu.memory_space<vmem>>, vector<1x6x2x128xf32>
    %55 = vector.shape_cast %54 : vector<1x6x2x128xf32> to vector<6x2x128xf32>
    %56 = vector.extract_strided_slice %51 {offsets = [0, 0, 0], sizes = [1, 2, 128], strides = [1, 1, 1]} : vector<3x2x128xf32> to vector<1x2x128xf32>
    %57 = vector.shape_cast %56 : vector<1x2x128xf32> to vector<2x128xf32>
    %58 = vector.extract_strided_slice %55 {offsets = [0, 0, 0], sizes = [1, 2, 128], strides = [1, 1, 1]} : vector<6x2x128xf32> to vector<1x2x128xf32>
    %59 = vector.shape_cast %58 : vector<1x2x128xf32> to vector<2x128xf32>
    %60 = arith.mulf %57, %59 : vector<2x128xf32>
    %61 = vector.extract_strided_slice %51 {offsets = [1, 0, 0], sizes = [1, 2, 128], strides = [1, 1, 1]} : vector<3x2x128xf32> to vector<1x2x128xf32>
    %62 = vector.shape_cast %61 : vector<1x2x128xf32> to vector<2x128xf32>
    %63 = vector.extract_strided_slice %55 {offsets = [1, 0, 0], sizes = [1, 2, 128], strides = [1, 1, 1]} : vector<6x2x128xf32> to vector<1x2x128xf32>
    %64 = vector.shape_cast %63 : vector<1x2x128xf32> to vector<2x128xf32>
    %65 = arith.mulf %62, %64 : vector<2x128xf32>
    %66 = arith.addf %60, %65 : vector<2x128xf32>
    %67 = vector.extract_strided_slice %51 {offsets = [2, 0, 0], sizes = [1, 2, 128], strides = [1, 1, 1]} : vector<3x2x128xf32> to vector<1x2x128xf32>
    %68 = vector.shape_cast %67 : vector<1x2x128xf32> to vector<2x128xf32>
    %69 = vector.extract_strided_slice %55 {offsets = [2, 0, 0], sizes = [1, 2, 128], strides = [1, 1, 1]} : vector<6x2x128xf32> to vector<1x2x128xf32>
    %70 = vector.shape_cast %69 : vector<1x2x128xf32> to vector<2x128xf32>
    %71 = arith.mulf %68, %70 : vector<2x128xf32>
    %72 = arith.addf %66, %71 : vector<2x128xf32>
    %73 = arith.mulf %72, %13 : vector<2x128xf32>
    %74 = math.absf %73 : vector<2x128xf32>
    %cst_46 = arith.constant dense<0.000000e+00> : vector<128xf32>
    %75 = vector.multi_reduction <add>, %74, %cst_46 [0] : vector<2x128xf32> to vector<128xf32>
    %76 = vector.shape_cast %75 : vector<128xf32> to vector<1x128xf32>
    %cst_47 = arith.constant 0.000000e+00 : f32
    %77 = vector.broadcast %cst_47 : f32 to vector<1x128xf32>
    %78 = arith.subf %77, %76 : vector<1x128xf32>
    %79 = vector.extract_strided_slice %53 {offsets = [0, 0, 0], sizes = [1, 2, 128], strides = [1, 1, 1]} : vector<3x2x128xf32> to vector<1x2x128xf32>
    %80 = vector.shape_cast %79 : vector<1x2x128xf32> to vector<2x128xf32>
    %81 = vector.extract_strided_slice %55 {offsets = [3, 0, 0], sizes = [1, 2, 128], strides = [1, 1, 1]} : vector<6x2x128xf32> to vector<1x2x128xf32>
    %82 = vector.shape_cast %81 : vector<1x2x128xf32> to vector<2x128xf32>
    %83 = arith.mulf %80, %82 : vector<2x128xf32>
    %84 = vector.extract_strided_slice %53 {offsets = [1, 0, 0], sizes = [1, 2, 128], strides = [1, 1, 1]} : vector<3x2x128xf32> to vector<1x2x128xf32>
    %85 = vector.shape_cast %84 : vector<1x2x128xf32> to vector<2x128xf32>
    %86 = vector.extract_strided_slice %55 {offsets = [4, 0, 0], sizes = [1, 2, 128], strides = [1, 1, 1]} : vector<6x2x128xf32> to vector<1x2x128xf32>
    %87 = vector.shape_cast %86 : vector<1x2x128xf32> to vector<2x128xf32>
    %88 = arith.mulf %85, %87 : vector<2x128xf32>
    %89 = arith.addf %83, %88 : vector<2x128xf32>
    %90 = vector.extract_strided_slice %53 {offsets = [2, 0, 0], sizes = [1, 2, 128], strides = [1, 1, 1]} : vector<3x2x128xf32> to vector<1x2x128xf32>
    %91 = vector.shape_cast %90 : vector<1x2x128xf32> to vector<2x128xf32>
    %92 = vector.extract_strided_slice %55 {offsets = [5, 0, 0], sizes = [1, 2, 128], strides = [1, 1, 1]} : vector<6x2x128xf32> to vector<1x2x128xf32>
    %93 = vector.shape_cast %92 : vector<1x2x128xf32> to vector<2x128xf32>
    %94 = arith.mulf %91, %93 : vector<2x128xf32>
    %95 = arith.addf %89, %94 : vector<2x128xf32>
    %96 = arith.mulf %95, %15 : vector<2x128xf32>
    %97 = math.absf %96 : vector<2x128xf32>
    %cst_48 = arith.constant dense<0.000000e+00> : vector<128xf32>
    %98 = vector.multi_reduction <add>, %97, %cst_48 [0] : vector<2x128xf32> to vector<128xf32>
    %99 = vector.shape_cast %98 : vector<128xf32> to vector<1x128xf32>
    %cst_49 = arith.constant 0.000000e+00 : f32
    %100 = vector.broadcast %cst_49 : f32 to vector<1x128xf32>
    %101 = arith.subf %100, %99 : vector<1x128xf32>
    %102 = vector.extract_strided_slice %51 {offsets = [0, 0, 0], sizes = [1, 2, 128], strides = [1, 1, 1]} : vector<3x2x128xf32> to vector<1x2x128xf32>
    %103 = vector.shape_cast %102 : vector<1x2x128xf32> to vector<2x128xf32>
    %104 = vector.extract_strided_slice %53 {offsets = [0, 0, 0], sizes = [1, 2, 128], strides = [1, 1, 1]} : vector<3x2x128xf32> to vector<1x2x128xf32>
    %105 = vector.shape_cast %104 : vector<1x2x128xf32> to vector<2x128xf32>
    %106 = arith.mulf %103, %105 : vector<2x128xf32>
    %107 = vector.extract_strided_slice %51 {offsets = [1, 0, 0], sizes = [1, 2, 128], strides = [1, 1, 1]} : vector<3x2x128xf32> to vector<1x2x128xf32>
    %108 = vector.shape_cast %107 : vector<1x2x128xf32> to vector<2x128xf32>
    %109 = vector.extract_strided_slice %53 {offsets = [1, 0, 0], sizes = [1, 2, 128], strides = [1, 1, 1]} : vector<3x2x128xf32> to vector<1x2x128xf32>
    %110 = vector.shape_cast %109 : vector<1x2x128xf32> to vector<2x128xf32>
    %111 = arith.mulf %108, %110 : vector<2x128xf32>
    %112 = arith.addf %106, %111 : vector<2x128xf32>
    %113 = vector.extract_strided_slice %51 {offsets = [2, 0, 0], sizes = [1, 2, 128], strides = [1, 1, 1]} : vector<3x2x128xf32> to vector<1x2x128xf32>
    %114 = vector.shape_cast %113 : vector<1x2x128xf32> to vector<2x128xf32>
    %115 = vector.extract_strided_slice %53 {offsets = [2, 0, 0], sizes = [1, 2, 128], strides = [1, 1, 1]} : vector<3x2x128xf32> to vector<1x2x128xf32>
    %116 = vector.shape_cast %115 : vector<1x2x128xf32> to vector<2x128xf32>
    %117 = arith.mulf %114, %116 : vector<2x128xf32>
    %118 = arith.addf %112, %117 : vector<2x128xf32>
    %119 = arith.mulf %118, %15 : vector<2x128xf32>
    %120 = math.absf %119 : vector<2x128xf32>
    %cst_50 = arith.constant dense<0.000000e+00> : vector<128xf32>
    %121 = vector.multi_reduction <add>, %120, %cst_50 [0] : vector<2x128xf32> to vector<128xf32>
    %122 = vector.shape_cast %121 : vector<128xf32> to vector<1x128xf32>
    %c0_51 = arith.constant 0 : index
    %c0_52 = arith.constant 0 : index
    %c0_53 = arith.constant 0 : index
    %c0_54 = arith.constant 0 : index
    %123 = vector.load %arg10[%c0_51, %c0_52, %c0_53, %c0_54] : memref<1x1x6x128xf32, #tpu.memory_space<vmem>>, vector<1x1x1x128xf32>
    %124 = vector.shape_cast %123 : vector<1x1x1x128xf32> to vector<1x128xf32>
    %125 = vector.shape_cast %7 : vector<1x128xf32> to vector<1x1x1x128xf32>
    tpu.vector_store %arg10[%c0_51, %c0_52, %c0_53, %c0_54], %125 {strides = array<i32>} : memref<1x1x6x128xf32, #tpu.memory_space<vmem>>, vector<1x1x1x128xf32>,
    %c0_55 = arith.constant 0 : index
    %c0_56 = arith.constant 0 : index
    %c1_57 = arith.constant 1 : index
    %c0_58 = arith.constant 0 : index
    %126 = vector.load %arg10[%c0_55, %c0_56, %c1_57, %c0_58] : memref<1x1x6x128xf32, #tpu.memory_space<vmem>>, vector<1x1x1x128xf32>
    %127 = vector.shape_cast %126 : vector<1x1x1x128xf32> to vector<1x128xf32>
    %128 = vector.shape_cast %32 : vector<1x128xf32> to vector<1x1x1x128xf32>
    tpu.vector_store %arg10[%c0_55, %c0_56, %c1_57, %c0_58], %128 {strides = array<i32>} : memref<1x1x6x128xf32, #tpu.memory_space<vmem>>, vector<1x1x1x128xf32>,
    %c0_59 = arith.constant 0 : index
    %c0_60 = arith.constant 0 : index
    %c2 = arith.constant 2 : index
    %c0_61 = arith.constant 0 : index
    %129 = vector.load %arg10[%c0_59, %c0_60, %c2, %c0_61] : memref<1x1x6x128xf32, #tpu.memory_space<vmem>>, vector<1x1x1x128xf32>
    %130 = vector.shape_cast %129 : vector<1x1x1x128xf32> to vector<1x128xf32>
    %131 = vector.shape_cast %49 : vector<1x128xf32> to vector<1x1x1x128xf32>
    tpu.vector_store %arg10[%c0_59, %c0_60, %c2, %c0_61], %131 {strides = array<i32>} : memref<1x1x6x128xf32, #tpu.memory_space<vmem>>, vector<1x1x1x128xf32>,
    %c0_62 = arith.constant 0 : index
    %c0_63 = arith.constant 0 : index
    %c3 = arith.constant 3 : index
    %c0_64 = arith.constant 0 : index
    %132 = vector.load %arg10[%c0_62, %c0_63, %c3, %c0_64] : memref<1x1x6x128xf32, #tpu.memory_space<vmem>>, vector<1x1x1x128xf32>
    %133 = vector.shape_cast %132 : vector<1x1x1x128xf32> to vector<1x128xf32>
    %134 = vector.shape_cast %78 : vector<1x128xf32> to vector<1x1x1x128xf32>
    tpu.vector_store %arg10[%c0_62, %c0_63, %c3, %c0_64], %134 {strides = array<i32>} : memref<1x1x6x128xf32, #tpu.memory_space<vmem>>, vector<1x1x1x128xf32>,
    %c0_65 = arith.constant 0 : index
    %c0_66 = arith.constant 0 : index
    %c4 = arith.constant 4 : index
    %c0_67 = arith.constant 0 : index
    %135 = vector.load %arg10[%c0_65, %c0_66, %c4, %c0_67] : memref<1x1x6x128xf32, #tpu.memory_space<vmem>>, vector<1x1x1x128xf32>
    %136 = vector.shape_cast %135 : vector<1x1x1x128xf32> to vector<1x128xf32>
    %137 = vector.shape_cast %101 : vector<1x128xf32> to vector<1x1x1x128xf32>
    tpu.vector_store %arg10[%c0_65, %c0_66, %c4, %c0_67], %137 {strides = array<i32>} : memref<1x1x6x128xf32, #tpu.memory_space<vmem>>, vector<1x1x1x128xf32>,
    %c0_68 = arith.constant 0 : index
    %c0_69 = arith.constant 0 : index
    %c5 = arith.constant 5 : index
    %c0_70 = arith.constant 0 : index
    %138 = vector.load %arg10[%c0_68, %c0_69, %c5, %c0_70] : memref<1x1x6x128xf32, #tpu.memory_space<vmem>>, vector<1x1x1x128xf32>
    %139 = vector.shape_cast %138 : vector<1x1x1x128xf32> to vector<1x128xf32>
    %140 = vector.shape_cast %122 : vector<1x128xf32> to vector<1x1x1x128xf32>
    tpu.vector_store %arg10[%c0_68, %c0_69, %c5, %c0_70], %140 {strides = array<i32>} : memref<1x1x6x128xf32, #tpu.memory_space<vmem>>, vector<1x1x1x128xf32>,
    return
  }
  func.func @transform_0(%arg0: i32, %arg1: i32) -> (i32, i32, i32, i32) {
    %c0_i32 = arith.constant 0 : i32
    %c0_i32_0 = arith.constant 0 : i32
    %c0_i32_1 = arith.constant 0 : i32
    return %arg0, %c0_i32, %arg1, %c0_i32_0 : i32, i32, i32, i32
  }
  func.func @transform_1(%arg0: i32, %arg1: i32) -> (i32, i32, i32, i32) {
    %c0_i32 = arith.constant 0 : i32
    %c0_i32_0 = arith.constant 0 : i32
    %c0_i32_1 = arith.constant 0 : i32
    return %arg0, %c0_i32, %arg1, %c0_i32_0 : i32, i32, i32, i32
  }
  func.func @transform_2(%arg0: i32, %arg1: i32) -> (i32, i32, i32, i32) {
    %c0_i32 = arith.constant 0 : i32
    %c0_i32_0 = arith.constant 0 : i32
    %c0_i32_1 = arith.constant 0 : i32
    return %arg0, %c0_i32, %arg1, %c0_i32_0 : i32, i32, i32, i32
  }
  func.func @transform_3(%arg0: i32, %arg1: i32) -> (i32, i32, i32, i32) {
    %c0_i32 = arith.constant 0 : i32
    %c0_i32_0 = arith.constant 0 : i32
    %c0_i32_1 = arith.constant 0 : i32
    return %arg0, %c0_i32, %arg1, %c0_i32_0 : i32, i32, i32, i32
  }
  func.func @transform_4(%arg0: i32, %arg1: i32) -> (i32, i32, i32, i32) {
    %c0_i32 = arith.constant 0 : i32
    %c0_i32_0 = arith.constant 0 : i32
    %c0_i32_1 = arith.constant 0 : i32
    return %arg0, %c0_i32, %arg1, %c0_i32_0 : i32, i32, i32, i32
  }
  func.func @transform_5(%arg0: i32, %arg1: i32) -> (i32, i32, i32, i32) {
    %c0_i32 = arith.constant 0 : i32
    %c0_i32_0 = arith.constant 0 : i32
    %c0_i32_1 = arith.constant 0 : i32
    return %arg0, %c0_i32, %arg1, %c0_i32_0 : i32, i32, i32, i32
  }
  func.func @transform_6(%arg0: i32, %arg1: i32) -> (i32, i32, i32, i32) {
    %c0_i32 = arith.constant 0 : i32
    %c0_i32_0 = arith.constant 0 : i32
    %c0_i32_1 = arith.constant 0 : i32
    return %arg0, %c0_i32, %arg1, %c0_i32_0 : i32, i32, i32, i32
  }
  func.func @transform_7(%arg0: i32, %arg1: i32) -> (i32, i32, i32, i32) {
    %c0_i32 = arith.constant 0 : i32
    %c0_i32_0 = arith.constant 0 : i32
    %c0_i32_1 = arith.constant 0 : i32
    return %arg0, %c0_i32, %arg1, %c0_i32_0 : i32, i32, i32, i32
  }
  func.func @transform_8(%arg0: i32, %arg1: i32) -> (i32, i32, i32, i32) {
    %c0_i32 = arith.constant 0 : i32
    %c0_i32_0 = arith.constant 0 : i32
    %c0_i32_1 = arith.constant 0 : i32
    return %arg0, %arg1, %c0_i32, %c0_i32_0 : i32, i32, i32, i32
  }
}

</mosaic_0001>

<llo_original>
// kernel: tpu_custom_call.1
$region0: #{tpu_custom_call.1}
  #allocation0 [shape = 'u32[]', space=smem, size = 0x4, offset = 0x4, fixed_abs, tag = 'smem constant byte address 0x4 - core index']
  #allocation1 [shape = 'u32[144,128]{1,0:T(1,128)}', space=vmem, size = 0x12000, scoped, tag = 'internal scratch']
  %s0 = inlined_call_operand.hbm [shape: f32[2,4,2,128], index: 0, kind: input, shape index: {}]
  %s1 = inlined_call_operand.hbm [shape: f32[2,4,2,128], index: 1, kind: input, shape index: {}]
  %s2 = inlined_call_operand.hbm [shape: f32[2,1,2,128], index: 2, kind: input, shape index: {}]
  %s3 = inlined_call_operand.hbm [shape: f32[2,1,2,128], index: 3, kind: input, shape index: {}]
  %s4 = inlined_call_operand.vmem [shape: f32[2,3,2,128], index: 4, kind: input, shape index: {}]
  %s5 = inlined_call_operand.hbm [shape: f32[2,3,2,128], index: 5, kind: input, shape index: {}]
  %s6 = inlined_call_operand.hbm [shape: f32[2,6,2,128], index: 6, kind: input, shape index: {}]
  %s7 = inlined_call_operand.vmem [shape: f32[2,2,2,128], index: 7, kind: input, shape index: {}]
  %s8 = inlined_call_operand.vmem [shape: f32[2,1,6,128], index: 8, kind: output, shape index: {}]
  %s9 = sld [smem:[#allocation0]]
  $region89: #{tpu_custom_call.1} parent=0
    _
  %s11 = ssub.s32 1, %s9
  %s12 = scalar_select 0, %s11, %s9
  $region1: #{tpu_custom_call.1} parent=0
    #allocation2 [shape = 'u8[8192]{0}', space=vmem, size = 0x2000, scoped, tag = 'input window, operand 0']
    #allocation3 [shape = 's32[2]{0}', space=sflag, size = 0x8, scoped, tag = 'scoped memory for tpu_custom_call.1']
    #allocation4 [shape = 'u8[8192]{0}', space=vmem, size = 0x2000, scoped, tag = 'input window, operand 1']
    #allocation5 [shape = 's32[2]{0}', space=sflag, size = 0x8, scoped, tag = 'scoped memory for tpu_custom_call.1']
    #allocation6 [shape = 'u8[2048]{0}', space=vmem, size = 0x800, scoped, tag = 'input window, operand 2']
    #allocation7 [shape = 'u8[2048]{0}', space=vmem, size = 0x800, scoped, tag = 'input window, operand 3']
    #allocation8 [shape = 's32[2]{0}', space=sflag, size = 0x8, scoped, tag = 'scoped memory for tpu_custom_call.1']
    #allocation9 [shape = 'u8[6144]{0}', space=vmem, size = 0x1800, scoped, tag = 'input window, operand 5']
    #allocation10 [shape = 'u8[12288]{0}', space=vmem, size = 0x3000, scoped, tag = 'input window, operand 6']
    #allocation11 [shape = 's32[2]{0}', space=sflag, size = 0x8, scoped, tag = 'scoped memory for tpu_custom_call.1']
    %13 = vsyncpa [#allocation3], 0
    %s14 = scalar_lea.sflag [#allocation3], 1
    %15 = vsyncpa %s14, 0
    %16 = vsyncpa [#allocation5], 0
    %s17 = scalar_lea.sflag [#allocation5], 1
    %18 = vsyncpa %s17, 0
    %19 = vsyncpa [#allocation8], 0
    %s20 = scalar_lea.sflag [#allocation8], 1
    %21 = vsyncpa %s20, 0
    %22 = vsyncpa [#allocation11], 0
    %s23 = scalar_lea.sflag [#allocation11], 1
    %24 = vsyncpa %s23, 0
    loop: start=0, step=1, limit=4
    $region2: #{tpu_custom_call.1} parent=1 // loop_pre_header
      _
    $region3: #{tpu_custom_call.1} parent=1 // loop_header
      %s26 = sphi 0, %s30
      %p27 = scmp.ge.s32.totalorder %s26, 4
      %s33 = sphi 0, %s45
      %s34 = sphi 0, %s41
      %s35 = sphi 0, %s33
      %s36 = sphi 0, %s34
      %s37 = sphi 0, %s35
      %s38 = sphi 0, %s36
      %s50 = sphi 0, %s52
      %s53 = sphi 0, %s50
      %s54 = sphi 0, %s53
      %s70 = sphi 0, %s54
      %s78 = sphi 0, %s80
      %s81 = sphi 0, %s78
      %s82 = sphi 0, %s81
      %s98 = sphi 0, %s82
      %s106 = sphi 0, %s108
      %s109 = sphi 0, %s106
      %s110 = sphi 0, %s109
      %s126 = sphi 0, %s110
      %s134 = sphi 0, %s136
      %s137 = sphi 0, %s134
      %s138 = sphi 0, %s137
      %s154 = sphi 0, %s138
      %s162 = sphi 0, %s164
      %s165 = sphi 0, %s162
      %s166 = sphi 0, %s165
      %s182 = sphi 0, %s166
      %s190 = sphi 0, %s192
      %s193 = sphi 0, %s190
      %s194 = sphi 0, %s193
      %s210 = sphi 0, %s194
      %s218 = sphi 0, %s220
      %s221 = sphi 0, %s218
      %s222 = sphi 0, %s221
      %s238 = sphi 0, %s222
      %s246 = sphi 0, %s248
      %s249 = sphi 0, %s246
      %s250 = sphi 0, %s249
      %s266 = sphi 0, %s250
      %s274 = sphi 0, %s276
      %s277 = sphi 0, %s274
      %s278 = sphi 0, %s277
      %s294 = sphi 0, %s278
    $region4: #{tpu_custom_call.1} parent=1 // loop_header_branch
      %29 = sbr.rel (%p27) target = $region8
    $region5: #{tpu_custom_call.1} parent=1 // loop_body
      %s31 = ssub.s32 %s26, 1
      %s32 = ssub.s32 %s26, 2
      %s39 = sadd.s32 1, %s34
      %p40 = scmp.ge.s32.totalorder %s39, 1
      %s41 = scalar_select %p40, 0, %s39
      %s42 = sadd.s32 1, %s33
      %s43 = scalar_select %p40, %s42, %s33
      %p44 = scmp.ge.s32.totalorder %s43, 2
      %s45 = scalar_select %p44, 0, %s43
      %s46 = ssub.s32 %s33, %s45
      %s47 = ssub.s32 %s34, %s41
      %s48 = sor.u32 %s46, %s47
      %p49 = scmp.eq.s32.totalorder %s48, 0
      %s51 = sadd.s32 %s50, 1
      %s52 = scalar_select %p49, %s50, %s51
      %p55 = pneg %p49
      %p56 = scmp.eq.s32.totalorder %s26, 1
      %p57 = por %p55, %p56
      %p58 = scmp.ne.s32.totalorder %s50, %s53
      %p59 = scmp.eq.s32.totalorder %s26, 0
      %p60 = por %p58, %p59
      %p61 = scmp.ne.s32.totalorder %s50, %s53
      %p62 = scmp.eq.s32.totalorder %s31, 1
      %p63 = por %p61, %p62
      %p64 = scmp.ne.s32.totalorder %s53, %s54
      %p65 = scmp.eq.s32.totalorder %s31, 0
      %p66 = por %p64, %p65
      %p67 = scmp.ne.s32.totalorder %s53, %s54
      %p68 = scmp.eq.s32.totalorder %s32, 1
      %p69 = por %p67, %p68
      %p71 = scmp.ne.s32.totalorder %s54, %s70
      %p72 = scmp.eq.s32.totalorder %s32, 0
      %p73 = por %p71, %p72
      %s74 = ssub.s32 %s33, %s45
      %s75 = ssub.s32 %s34, %s41
      %s76 = sor.u32 %s74, %s75
      %p77 = scmp.eq.s32.totalorder %s76, 0
      %s79 = sadd.s32 %s78, 1
      %s80 = scalar_select %p77, %s78, %s79
      %p83 = pneg %p77
      %p84 = scmp.eq.s32.totalorder %s26, 1
      %p85 = por %p83, %p84
      %p86 = scmp.ne.s32.totalorder %s78, %s81
      %p87 = scmp.eq.s32.totalorder %s26, 0
      %p88 = por %p86, %p87
      %p89 = scmp.ne.s32.totalorder %s78, %s81
      %p90 = scmp.eq.s32.totalorder %s31, 1
      %p91 = por %p89, %p90
      %p92 = scmp.ne.s32.totalorder %s81, %s82
      %p93 = scmp.eq.s32.totalorder %s31, 0
      %p94 = por %p92, %p93
      %p95 = scmp.ne.s32.totalorder %s81, %s82
      %p96 = scmp.eq.s32.totalorder %s32, 1
      %p97 = por %p95, %p96
      %p99 = scmp.ne.s32.totalorder %s82, %s98
      %p100 = scmp.eq.s32.totalorder %s32, 0
      %p101 = por %p99, %p100
      %s102 = ssub.s32 %s33, %s45
      %s103 = ssub.s32 %s34, %s41
      %s104 = sor.u32 %s102, %s103
      %p105 = scmp.eq.s32.totalorder %s104, 0
      %s107 = sadd.s32 %s106, 1
      %s108 = scalar_select %p105, %s106, %s107
      %p111 = pneg %p105
      %p112 = scmp.eq.s32.totalorder %s26, 1
      %p113 = por %p111, %p112
      %p114 = scmp.ne.s32.totalorder %s106, %s109
      %p115 = scmp.eq.s32.totalorder %s26, 0
      %p116 = por %p114, %p115
      %p117 = scmp.ne.s32.totalorder %s106, %s109
      %p118 = scmp.eq.s32.totalorder %s31, 1
      %p119 = por %p117, %p118
      %p120 = scmp.ne.s32.totalorder %s109, %s110
      %p121 = scmp.eq.s32.totalorder %s31, 0
      %p122 = por %p120, %p121
      %p123 = scmp.ne.s32.totalorder %s109, %s110
      %p124 = scmp.eq.s32.totalorder %s32, 1
      %p125 = por %p123, %p124
      %p127 = scmp.ne.s32.totalorder %s110, %s126
      %p128 = scmp.eq.s32.totalorder %s32, 0
      %p129 = por %p127, %p128
      %s130 = ssub.s32 %s33, %s45
      %s131 = ssub.s32 %s34, %s41
      %s132 = sor.u32 %s130, %s131
      %p133 = scmp.eq.s32.totalorder %s132, 0
      %s135 = sadd.s32 %s134, 1
      %s136 = scalar_select %p133, %s134, %s135
      %p139 = pneg %p133
      %p140 = scmp.eq.s32.totalorder %s26, 1
      %p141 = por %p139, %p140
      %p142 = scmp.ne.s32.totalorder %s134, %s137
      %p143 = scmp.eq.s32.totalorder %s26, 0
      %p144 = por %p142, %p143
      %p145 = scmp.ne.s32.totalorder %s134, %s137
      %p146 = scmp.eq.s32.totalorder %s31, 1
      %p147 = por %p145, %p146
      %p148 = scmp.ne.s32.totalorder %s137, %s138
      %p149 = scmp.eq.s32.totalorder %s31, 0
      %p150 = por %p148, %p149
      %p151 = scmp.ne.s32.totalorder %s137, %s138
      %p152 = scmp.eq.s32.totalorder %s32, 1
      %p153 = por %p151, %p152
      %p155 = scmp.ne.s32.totalorder %s138, %s154
      %p156 = scmp.eq.s32.totalorder %s32, 0
      %p157 = por %p155, %p156
      %s158 = ssub.s32 %s33, %s45
      %s159 = ssub.s32 %s34, %s41
      %s160 = sor.u32 %s158, %s159
      %p161 = scmp.eq.s32.totalorder %s160, 0
      %s163 = sadd.s32 %s162, 1
      %s164 = scalar_select %p161, %s162, %s163
      %p167 = pneg %p161
      %p168 = scmp.eq.s32.totalorder %s26, 1
      %p169 = por %p167, %p168
      %p170 = scmp.ne.s32.totalorder %s162, %s165
      %p171 = scmp.eq.s32.totalorder %s26, 0
      %p172 = por %p170, %p171
      %p173 = scmp.ne.s32.totalorder %s162, %s165
      %p174 = scmp.eq.s32.totalorder %s31, 1
      %p175 = por %p173, %p174
      %p176 = scmp.ne.s32.totalorder %s165, %s166
      %p177 = scmp.eq.s32.totalorder %s31, 0
      %p178 = por %p176, %p177
      %p179 = scmp.ne.s32.totalorder %s165, %s166
      %p180 = scmp.eq.s32.totalorder %s32, 1
      %p181 = por %p179, %p180
      %p183 = scmp.ne.s32.totalorder %s166, %s182
      %p184 = scmp.eq.s32.totalorder %s32, 0
      %p185 = por %p183, %p184
      %s186 = ssub.s32 %s33, %s45
      %s187 = ssub.s32 %s34, %s41
      %s188 = sor.u32 %s186, %s187
      %p189 = scmp.eq.s32.totalorder %s188, 0
      %s191 = sadd.s32 %s190, 1
      %s192 = scalar_select %p189, %s190, %s191
      %p195 = pneg %p189
      %p196 = scmp.eq.s32.totalorder %s26, 1
      %p197 = por %p195, %p196
      %p198 = scmp.ne.s32.totalorder %s190, %s193
      %p199 = scmp.eq.s32.totalorder %s26, 0
      %p200 = por %p198, %p199
      %p201 = scmp.ne.s32.totalorder %s190, %s193
      %p202 = scmp.eq.s32.totalorder %s31, 1
      %p203 = por %p201, %p202
      %p204 = scmp.ne.s32.totalorder %s193, %s194
      %p205 = scmp.eq.s32.totalorder %s31, 0
      %p206 = por %p204, %p205
      %p207 = scmp.ne.s32.totalorder %s193, %s194
      %p208 = scmp.eq.s32.totalorder %s32, 1
      %p209 = por %p207, %p208
      %p211 = scmp.ne.s32.totalorder %s194, %s210
      %p212 = scmp.eq.s32.totalorder %s32, 0
      %p213 = por %p211, %p212
      %s214 = ssub.s32 %s33, %s45
      %s215 = ssub.s32 %s34, %s41
      %s216 = sor.u32 %s214, %s215
      %p217 = scmp.eq.s32.totalorder %s216, 0
      %s219 = sadd.s32 %s218, 1
      %s220 = scalar_select %p217, %s218, %s219
      %p223 = pneg %p217
      %p224 = scmp.eq.s32.totalorder %s26, 1
      %p225 = por %p223, %p224
      %p226 = scmp.ne.s32.totalorder %s218, %s221
      %p227 = scmp.eq.s32.totalorder %s26, 0
      %p228 = por %p226, %p227
      %p229 = scmp.ne.s32.totalorder %s218, %s221
      %p230 = scmp.eq.s32.totalorder %s31, 1
      %p231 = por %p229, %p230
      %p232 = scmp.ne.s32.totalorder %s221, %s222
      %p233 = scmp.eq.s32.totalorder %s31, 0
      %p234 = por %p232, %p233
      %p235 = scmp.ne.s32.totalorder %s221, %s222
      %p236 = scmp.eq.s32.totalorder %s32, 1
      %p237 = por %p235, %p236
      %p239 = scmp.ne.s32.totalorder %s222, %s238
      %p240 = scmp.eq.s32.totalorder %s32, 0
      %p241 = por %p239, %p240
      %s242 = ssub.s32 %s33, %s45
      %s243 = ssub.s32 %s34, %s41
      %s244 = sor.u32 %s242, %s243
      %p245 = scmp.eq.s32.totalorder %s244, 0
      %s247 = sadd.s32 %s246, 1
      %s248 = scalar_select %p245, %s246, %s247
      %p251 = pneg %p245
      %p252 = scmp.eq.s32.totalorder %s26, 1
      %p253 = por %p251, %p252
      %p254 = scmp.ne.s32.totalorder %s246, %s249
      %p255 = scmp.eq.s32.totalorder %s26, 0
      %p256 = por %p254, %p255
      %p257 = scmp.ne.s32.totalorder %s246, %s249
      %p258 = scmp.eq.s32.totalorder %s31, 1
      %p259 = por %p257, %p258
      %p260 = scmp.ne.s32.totalorder %s249, %s250
      %p261 = scmp.eq.s32.totalorder %s31, 0
      %p262 = por %p260, %p261
      %p263 = scmp.ne.s32.totalorder %s249, %s250
      %p264 = scmp.eq.s32.totalorder %s32, 1
      %p265 = por %p263, %p264
      %p267 = scmp.ne.s32.totalorder %s250, %s266
      %p268 = scmp.eq.s32.totalorder %s32, 0
      %p269 = por %p267, %p268
      %s270 = ssub.s32 %s33, %s45
      %s271 = ssub.s32 %s34, %s41
      %s272 = sor.u32 %s270, %s271
      %p273 = scmp.eq.s32.totalorder %s272, 0
      %s275 = sadd.s32 %s274, 1
      %s276 = scalar_select %p273, %s274, %s275
      %p279 = pneg %p273
      %p280 = scmp.eq.s32.totalorder %s26, 1
      %p281 = por %p279, %p280
      %p282 = scmp.ne.s32.totalorder %s274, %s277
      %p283 = scmp.eq.s32.totalorder %s26, 0
      %p284 = por %p282, %p283
      %p285 = scmp.ne.s32.totalorder %s274, %s277
      %p286 = scmp.eq.s32.totalorder %s31, 1
      %p287 = por %p285, %p286
      %p288 = scmp.ne.s32.totalorder %s277, %s278
      %p289 = scmp.eq.s32.totalorder %s31, 0
      %p290 = por %p288, %p289
      %p291 = scmp.ne.s32.totalorder %s277, %s278
      %p292 = scmp.eq.s32.totalorder %s32, 1
      %p293 = por %p291, %p292
      %p295 = scmp.ne.s32.totalorder %s278, %s294
      %p296 = scmp.eq.s32.totalorder %s32, 0
      %p297 = por %p295, %p296
      %p298 = scmp.le.s32.totalorder 1, %s26
      %p299 = scmp.lt.s32.totalorder %s26, 3
      %p300 = pnand %p298, %p299
      %p301 = pneg %p300
      // Predicated region
      $region9: #{tpu_custom_call.1} parent=5 // pred_check
        _
      $region10: #{tpu_custom_call.1} parent=5 // pred_check_branch
        %303 = sbr.rel (%p300) target = $region12
      $region11: #{tpu_custom_call.1} parent=5 // pred_region
        %s304 = ssub.s32 %s26, 1
      $region12: #{tpu_custom_call.1} parent=5 // pred_fallthru
        _
      %p305 = scmp.lt.s32.totalorder %s26, 2
      // Predicated region
      $region13: #{tpu_custom_call.1} parent=5 // pred_check
        %p306 = pneg %p305
      $region14: #{tpu_custom_call.1} parent=5 // pred_check_branch
        %308 = sbr.rel (%p306) target = $region16
      $region15: #{tpu_custom_call.1} parent=5 // pred_region
        // Predicated region
        $region17: #{tpu_custom_call.1} parent=15 // pred_check
          %p309 = pneg %p60
        $region18: #{tpu_custom_call.1} parent=15 // pred_check_branch
          %311 = sbr.rel (%p309) target = $region20
        $region19: #{tpu_custom_call.1} parent=15 // pred_region
          %s312 = sand.u32 %s50, 1
          %s313 = scalar_lea.sflag [#allocation3], %s312
          %s314 = sand.u32 %s50, 1
          %s315 = smul.addr %s314, 8
          %s316 = scalar_lea.vmem [#allocation2], %s315
          %s318 = ssub.s32 128, 128
          %319 = vsyncadd %s313, %s318
          %s320 = smul.addr %s33, 4
          %s321 = sadd.s32 %s34, %s320
          %s322 = smul.addr %s321, 32
          %s323 = scalar_lea.hbm %s0, %s322
          %s324 = sshll.u32 %s316, 4
          %s325 = int_to_ptr.vmem [resolvable:$true] %s324
          %330 = dma.hbm_to_vmem [thread:$0]  %s323, 128, %s325, %s313, 32, 32, 2
        $region20: #{tpu_custom_call.1} parent=15 // pred_fallthru
          _
        // Predicated region
        $region21: #{tpu_custom_call.1} parent=15 // pred_check
          %p331 = pneg %p88
        $region22: #{tpu_custom_call.1} parent=15 // pred_check_branch
          %333 = sbr.rel (%p331) target = $region24
        $region23: #{tpu_custom_call.1} parent=15 // pred_region
          %s334 = sand.u32 %s26, 1
          %s335 = scalar_lea.sflag [#allocation5], %s334
          %s336 = sand.u32 %s78, 1
          %s337 = smul.addr %s336, 8
          %s338 = scalar_lea.vmem [#allocation4], %s337
          %s340 = ssub.s32 128, 128
          %341 = vsyncadd %s335, %s340
          %s342 = smul.addr %s33, 4
          %s343 = sadd.s32 %s34, %s342
          %s344 = smul.addr %s343, 32
          %s345 = scalar_lea.hbm %s1, %s344
          %s346 = sshll.u32 %s338, 4
          %s347 = int_to_ptr.vmem [resolvable:$true] %s346
          %352 = dma.hbm_to_vmem [thread:$0]  %s345, 128, %s347, %s335, 32, 32, 2
        $region24: #{tpu_custom_call.1} parent=15 // pred_fallthru
          _
        // Predicated region
        $region25: #{tpu_custom_call.1} parent=15 // pred_check
          %p353 = pneg %p116
        $region26: #{tpu_custom_call.1} parent=15 // pred_check_branch
          %355 = sbr.rel (%p353) target = $region28
        $region27: #{tpu_custom_call.1} parent=15 // pred_region
          %s356 = sand.u32 %s26, 1
          %s357 = scalar_lea.sflag [#allocation5], %s356
          %s358 = sand.u32 %s106, 1
          %s359 = smul.addr %s358, 2
          %s360 = scalar_lea.vmem [#allocation6], %s359
          %s362 = ssub.s32 32, 32
          %363 = vsyncadd %s357, %s362
          %s364 = sadd.s32 %s34, %s33
          %s365 = smul.addr %s364, 32
          %s366 = scalar_lea.hbm %s2, %s365
          %s368 = sshll.u32 %s360, 4
          %s369 = int_to_ptr.vmem [resolvable:$true] %s368
          %371 = dma.hbm_to_vmem [thread:$0]  %s366, 32, %s369, %s357
        $region28: #{tpu_custom_call.1} parent=15 // pred_fallthru
          _
        // Predicated region
        $region29: #{tpu_custom_call.1} parent=15 // pred_check
          %p372 = pneg %p144
        $region30: #{tpu_custom_call.1} parent=15 // pred_check_branch
          %374 = sbr.rel (%p372) target = $region32
        $region31: #{tpu_custom_call.1} parent=15 // pred_region
          %s375 = sand.u32 %s26, 1
          %s376 = scalar_lea.sflag [#allocation8], %s375
          %s377 = sand.u32 %s134, 1
          %s378 = smul.addr %s377, 2
          %s379 = scalar_lea.vmem [#allocation7], %s378
          %s381 = ssub.s32 32, 32
          %382 = vsyncadd %s376, %s381
          %s383 = sadd.s32 %s34, %s33
          %s384 = smul.addr %s383, 32
          %s385 = scalar_lea.hbm %s3, %s384
          %s387 = sshll.u32 %s379, 4
          %s388 = int_to_ptr.vmem [resolvable:$true] %s387
          %390 = dma.hbm_to_vmem [thread:$0]  %s385, 32, %s388, %s376
        $region32: #{tpu_custom_call.1} parent=15 // pred_fallthru
          _
        // Predicated region
        $region33: #{tpu_custom_call.1} parent=15 // pred_check
          %p391 = pneg %p172
        $region34: #{tpu_custom_call.1} parent=15 // pred_check_branch
          %393 = sbr.rel (%p391) target = $region36
        $region35: #{tpu_custom_call.1} parent=15 // pred_region
          %p394 = scmp.lt.s32.totalorder %s33, 1
          %s395 = scalar_select %p394, %s33, 1
          %p396 = scmp.lt.s32.totalorder %s34, 0
          %s397 = scalar_select %p396, %s34, 0
          %s398 = smul.addr %s395, 3
          %s399 = sadd.s32 %s397, %s398
          %s400 = smul.addr %s399, 2
          %s401 = scalar_lea.vmem %s4, %s400
        $region36: #{tpu_custom_call.1} parent=15 // pred_fallthru
          _
        // Predicated region
        $region37: #{tpu_custom_call.1} parent=15 // pred_check
          %p402 = pneg %p200
        $region38: #{tpu_custom_call.1} parent=15 // pred_check_branch
          %404 = sbr.rel (%p402) target = $region40
        $region39: #{tpu_custom_call.1} parent=15 // pred_region
          %s405 = sand.u32 %s26, 1
          %s406 = scalar_lea.sflag [#allocation8], %s405
          %s407 = sand.u32 %s190, 1
          %s408 = smul.addr %s407, 6
          %s409 = scalar_lea.vmem [#allocation9], %s408
          %s411 = ssub.s32 96, 96
          %412 = vsyncadd %s406, %s411
          %s413 = smul.addr %s33, 3
          %s414 = sadd.s32 %s34, %s413
          %s415 = smul.addr %s414, 32
          %s416 = scalar_lea.hbm %s5, %s415
          %s417 = sshll.u32 %s409, 4
          %s418 = int_to_ptr.vmem [resolvable:$true] %s417
          %423 = dma.hbm_to_vmem [thread:$0]  %s416, 96, %s418, %s406, 32, 32, 2
        $region40: #{tpu_custom_call.1} parent=15 // pred_fallthru
          _
        // Predicated region
        $region41: #{tpu_custom_call.1} parent=15 // pred_check
          %p424 = pneg %p228
        $region42: #{tpu_custom_call.1} parent=15 // pred_check_branch
          %426 = sbr.rel (%p424) target = $region44
        $region43: #{tpu_custom_call.1} parent=15 // pred_region
          %s427 = sand.u32 %s218, 1
          %s428 = scalar_lea.sflag [#allocation11], %s427
          %s429 = sand.u32 %s218, 1
          %s430 = smul.addr %s429, 12
          %s431 = scalar_lea.vmem [#allocation10], %s430
          %s433 = ssub.s32 192, 192
          %434 = vsyncadd %s428, %s433
          %s435 = smul.addr %s33, 6
          %s436 = sadd.s32 %s34, %s435
          %s437 = smul.addr %s436, 32
          %s438 = scalar_lea.hbm %s6, %s437
          %s439 = sshll.u32 %s431, 4
          %s440 = int_to_ptr.vmem [resolvable:$true] %s439
          %445 = dma.hbm_to_vmem [thread:$0]  %s438, 192, %s440, %s428, 32, 32, 2
        $region44: #{tpu_custom_call.1} parent=15 // pred_fallthru
          _
        // Predicated region
        $region45: #{tpu_custom_call.1} parent=15 // pred_check
          %p446 = pneg %p256
        $region46: #{tpu_custom_call.1} parent=15 // pred_check_branch
          %448 = sbr.rel (%p446) target = $region48
        $region47: #{tpu_custom_call.1} parent=15 // pred_region
          %p449 = scmp.lt.s32.totalorder %s33, 1
          %s450 = scalar_select %p449, %s33, 1
          %p451 = scmp.lt.s32.totalorder %s34, 0
          %s452 = scalar_select %p451, %s34, 0
          %s453 = smul.addr %s450, 2
          %s454 = sadd.s32 %s452, %s453
          %s455 = smul.addr %s454, 2
          %s456 = scalar_lea.vmem %s7, %s455
        $region48: #{tpu_custom_call.1} parent=15 // pred_fallthru
          _
      $region16: #{tpu_custom_call.1} parent=5 // pred_fallthru
        _
      %p457 = scmp.le.s32.totalorder 1, %s26
      %p458 = scmp.lt.s32.totalorder %s26, 3
      %p459 = pnand %p457, %p458
      %p460 = pneg %p459
      // Predicated region
      $region49: #{tpu_custom_call.1} parent=5 // pred_check
        _
      $region50: #{tpu_custom_call.1} parent=5 // pred_check_branch
        %462 = sbr.rel (%p459) target = $region52
      $region51: #{tpu_custom_call.1} parent=5 // pred_region
        %s463 = ssub.s32 %s26, 1
        %s464 = sand.u32 %s53, 1
        %s465 = scalar_lea.sflag [#allocation3], %s464
        %s466 = sand.u32 %s53, 1
        %s467 = smul.addr %s466, 8
        %s468 = scalar_lea.vmem [#allocation2], %s467
        // Predicated region
        $region53: #{tpu_custom_call.1} parent=51 // pred_check
          %p469 = pneg %p66
        $region54: #{tpu_custom_call.1} parent=51 // pred_check_branch
          %471 = sbr.rel (%p469) target = $region56
        $region55: #{tpu_custom_call.1} parent=51 // pred_region
          %472 = dma.done %s465, 128
        $region56: #{tpu_custom_call.1} parent=51 // pred_fallthru
          _
        %s473 = sand.u32 %s31, 1
        %s474 = scalar_lea.sflag [#allocation5], %s473
        %s475 = sand.u32 %s81, 1
        %s476 = smul.addr %s475, 8
        %s477 = scalar_lea.vmem [#allocation4], %s476
        // Predicated region
        $region57: #{tpu_custom_call.1} parent=51 // pred_check
          %p478 = pneg %p94
        $region58: #{tpu_custom_call.1} parent=51 // pred_check_branch
          %480 = sbr.rel (%p478) target = $region60
        $region59: #{tpu_custom_call.1} parent=51 // pred_region
          %481 = dma.done %s474, 128
        $region60: #{tpu_custom_call.1} parent=51 // pred_fallthru
          _
        %s482 = sand.u32 %s31, 1
        %s483 = scalar_lea.sflag [#allocation5], %s482
        %s484 = sand.u32 %s109, 1
        %s485 = smul.addr %s484, 2
        %s486 = scalar_lea.vmem [#allocation6], %s485
        // Predicated region
        $region61: #{tpu_custom_call.1} parent=51 // pred_check
          %p487 = pneg %p122
        $region62: #{tpu_custom_call.1} parent=51 // pred_check_branch
          %489 = sbr.rel (%p487) target = $region64
        $region63: #{tpu_custom_call.1} parent=51 // pred_region
          %490 = dma.done %s483, 32
        $region64: #{tpu_custom_call.1} parent=51 // pred_fallthru
          _
        %s491 = sand.u32 %s31, 1
        %s492 = scalar_lea.sflag [#allocation8], %s491
        %s493 = sand.u32 %s137, 1
        %s494 = smul.addr %s493, 2
        %s495 = scalar_lea.vmem [#allocation7], %s494
        // Predicated region
        $region65: #{tpu_custom_call.1} parent=51 // pred_check
          %p496 = pneg %p150
        $region66: #{tpu_custom_call.1} parent=51 // pred_check_branch
          %498 = sbr.rel (%p496) target = $region68
        $region67: #{tpu_custom_call.1} parent=51 // pred_region
          %499 = dma.done %s492, 32
        $region68: #{tpu_custom_call.1} parent=51 // pred_fallthru
          _
        %s500 = sand.u32 %s31, 1
        %s501 = scalar_lea.sflag [#allocation8], %s500
        %s502 = sand.u32 %s193, 1
        %s503 = smul.addr %s502, 6
        %s504 = scalar_lea.vmem [#allocation9], %s503
        // Predicated region
        $region69: #{tpu_custom_call.1} parent=51 // pred_check
          %p505 = pneg %p206
        $region70: #{tpu_custom_call.1} parent=51 // pred_check_branch
          %507 = sbr.rel (%p505) target = $region72
        $region71: #{tpu_custom_call.1} parent=51 // pred_region
          %508 = dma.done %s501, 96
        $region72: #{tpu_custom_call.1} parent=51 // pred_fallthru
          _
        %s509 = sand.u32 %s221, 1
        %s510 = scalar_lea.sflag [#allocation11], %s509
        %s511 = sand.u32 %s221, 1
        %s512 = smul.addr %s511, 12
        %s513 = scalar_lea.vmem [#allocation10], %s512
        // Predicated region
        $region73: #{tpu_custom_call.1} parent=51 // pred_check
          %p514 = pneg %p234
        $region74: #{tpu_custom_call.1} parent=51 // pred_check_branch
          %516 = sbr.rel (%p514) target = $region76
        $region75: #{tpu_custom_call.1} parent=51 // pred_region
          %517 = dma.done %s510, 192
        $region76: #{tpu_custom_call.1} parent=51 // pred_fallthru
          _
        %s518 = sand.u32 %s53, 1
        %s519 = scalar_lea.sflag [#allocation3], %s518
        %s520 = sand.u32 %s53, 1
        %s521 = smul.addr %s520, 8
        %s522 = scalar_lea.vmem [#allocation2], %s521
        %p523 = pneg %p66
        %p524 = pneg %p63
        %s525 = sand.u32 %s31, 1
        %s526 = scalar_lea.sflag [#allocation5], %s525
        %s527 = sand.u32 %s81, 1
        %s528 = smul.addr %s527, 8
        %s529 = scalar_lea.vmem [#allocation4], %s528
        %p530 = pneg %p94
        %p531 = pneg %p91
        %s532 = sand.u32 %s31, 1
        %s533 = scalar_lea.sflag [#allocation5], %s532
        %s534 = sand.u32 %s109, 1
        %s535 = smul.addr %s534, 2
        %s536 = scalar_lea.vmem [#allocation6], %s535
        %p537 = pneg %p122
        %p538 = pneg %p119
        %s539 = sand.u32 %s31, 1
        %s540 = scalar_lea.sflag [#allocation8], %s539
        %s541 = sand.u32 %s137, 1
        %s542 = smul.addr %s541, 2
        %s543 = scalar_lea.vmem [#allocation7], %s542
        %p544 = pneg %p150
        %p545 = pneg %p147
        %p546 = scmp.lt.s32.totalorder %s35, 1
        %s547 = scalar_select %p546, %s35, 1
        %p548 = scmp.lt.s32.totalorder %s36, 0
        %s549 = scalar_select %p548, %s36, 0
        %s550 = smul.addr %s547, 3
        %s551 = sadd.s32 %s549, %s550
        %s552 = smul.addr %s551, 2
        %s553 = scalar_lea.vmem %s4, %s552
        %p554 = pneg %p178
        %p555 = pneg %p175
        %s556 = sand.u32 %s31, 1
        %s557 = scalar_lea.sflag [#allocation8], %s556
        %s558 = sand.u32 %s193, 1
        %s559 = smul.addr %s558, 6
        %s560 = scalar_lea.vmem [#allocation9], %s559
        %p561 = pneg %p206
        %p562 = pneg %p203
        %s563 = sand.u32 %s221, 1
        %s564 = scalar_lea.sflag [#allocation11], %s563
        %s565 = sand.u32 %s221, 1
        %s566 = smul.addr %s565, 12
        %s567 = scalar_lea.vmem [#allocation10], %s566
        %p568 = pneg %p234
        %p569 = pneg %p231
        %p570 = scmp.lt.s32.totalorder %s35, 1
        %s571 = scalar_select %p570, %s35, 1
        %p572 = scmp.lt.s32.totalorder %s36, 0
        %s573 = scalar_select %p572, %s36, 0
        %s574 = smul.addr %s571, 2
        %s575 = sadd.s32 %s573, %s574
        %s576 = smul.addr %s575, 2
        %s577 = scalar_lea.vmem %s7, %s576
        %p578 = pneg %p262
        %p579 = pneg %p259
        %p580 = pneg %p290
        %p581 = pneg %p287
        %p582 = scmp.lt.s32.totalorder %s35, 1
        %s583 = scalar_select %p582, %s35, 1
        %p584 = scmp.lt.s32.totalorder %s36, 0
        %s585 = scalar_select %p584, %s36, 0
        %s586 = sadd.s32 %s585, %s583
        %s587 = smul.addr %s586, 8
        %s588 = scalar_lea.vmem %s8, %s587
        %p589 = scmp.lt.s32.totalorder %s35, 1
        %s590 = scalar_select %p589, %s35, 1
        %p591 = scmp.lt.s32.totalorder %s36, 0
        %s592 = scalar_select %p591, %s36, 0
        %s593 = smul.addr %s590, 3
        %s594 = sadd.s32 %s592, %s593
        %s595 = smul.addr %s594, 2
        %s596 = scalar_lea.vmem %s4, %s595
        %p597 = scmp.lt.s32.totalorder %s35, 1
        %s598 = scalar_select %p597, %s35, 1
        %p599 = scmp.lt.s32.totalorder %s36, 0
        %s600 = scalar_select %p599, %s36, 0
        %s601 = smul.addr %s598, 2
        %s602 = sadd.s32 %s600, %s601
        %s603 = smul.addr %s602, 2
        %s604 = scalar_lea.vmem %s7, %s603
        %p605 = scmp.lt.s32.totalorder %s35, 1
        %s606 = scalar_select %p605, %s35, 1
        %p607 = scmp.lt.s32.totalorder %s36, 0
        %s608 = scalar_select %p607, %s36, 0
        %s609 = sadd.s32 %s608, %s606
        %s610 = smul.addr %s609, 8
        %s611 = scalar_lea.vmem %s8, %s610
        %v612 = vld [vmem:[%s468] sm:$0x3]
        %v613 = vld [vmem:[%s468 + $0x2] sm:$0x3]
        %v614 = vld [vmem:[%s468 + $0x4] sm:$0x3]
        %v615 = vld [vmem:[%s468 + $0x6] sm:$0x3]
        %v616 = vld [vmem:[%s477] sm:$0x3]
        %v617 = vld [vmem:[%s477 + $0x2] sm:$0x3]
        %v618 = vld [vmem:[%s477 + $0x4] sm:$0x3]
        %v619 = vld [vmem:[%s477 + $0x6] sm:$0x3]
        %v620 = vsub.f32 %v612, %v616
        %v621 = vsub.f32 %v613, %v617
        %v622 = vsub.f32 %v614, %v618
        %v623 = vsub.f32 %v615, %v619
        %v624 = vmul.f32 %v620, %v620
        %v625 = vmul.f32 %v621, %v621
        %v626 = vmul.f32 %v622, %v622
        %v627 = vmul.f32 %v623, %v623
        %vm628 = vcmask 1041408
        %v629 = vsel %vm628, %v624, 0.0
        %v630 = vsel %vm628, %v625, 0.0
        %v631 = vadd.f32 %v629, %v630
        %v632 = vsel %vm628, %v626, 0.0
        %v633 = vadd.f32 %v631, %v632
        %v634 = vsel %vm628, %v627, 0.0
        %v635 = vadd.f32 %v633, %v634
        %v636 = vrot.slane %v635, 4
        %v637 = vadd.f32 %v635, %v636
        %v638 = vrot.slane %v637, 2
        %v639 = vadd.f32 %v637, %v638
        %v640 = vrot.slane %v639, 1
        %v641 = vadd.f32 %v639, %v640
        %v642 = vld [vmem:[%s486] sm:$0x3]
        %v643 = vld [vmem:[%s495] sm:$0x3]
        %v644 = vld [vmem:[%s604] sm:$0x3]
        %s645 = scalar_lea.vmem %s604, 2
        %v646 = vld [vmem:[%s645] sm:$0x3]
        %v647 = vlog2.pop %v642
        %v648 = vmul.f32 %v647, 0.6931472
        %v649 = vmax.f32 %v648, -100.0
        %v650 = vsub.f32 1.0, %v642
        %v651 = vlog2.pop %v650
        %v652 = vmul.f32 %v651, 0.6931472
        %v653 = vmax.f32 %v652, -100.0
        %v654 = vmul.f32 %v644, %v649
        %v655 = vsub.f32 1.0, %v644
        %v656 = vmul.f32 %v655, %v653
        %v657 = vadd.f32 %v654, %v656
        %v658 = vsel %vm628, %v657, 0.0
        %v659 = vrot.slane %v658, 4
        %v660 = vadd.f32 %v658, %v659
        %v661 = vrot.slane %v660, 2
        %v662 = vadd.f32 %v660, %v661
        %v663 = vrot.slane %v662, 1
        %v664 = vadd.f32 %v662, %v663
        %v665 = vsub.f32 0.0, %v664
        %v666 = vlog2.pop %v643
        %v667 = vmul.f32 %v666, 0.6931472
        %v668 = vmax.f32 %v667, -100.0
        %v669 = vsub.f32 1.0, %v643
        %v670 = vlog2.pop %v669
        %v671 = vmul.f32 %v670, 0.6931472
        %v672 = vmax.f32 %v671, -100.0
        %v673 = vmul.f32 %v646, %v668
        %v674 = vsub.f32 1.0, %v646
        %v675 = vmul.f32 %v674, %v672
        %v676 = vadd.f32 %v673, %v675
        %v677 = vsel %vm628, %v676, 0.0
        %v678 = vrot.slane %v677, 4
        %v679 = vadd.f32 %v677, %v678
        %v680 = vrot.slane %v679, 2
        %v681 = vadd.f32 %v679, %v680
        %v682 = vrot.slane %v681, 1
        %v683 = vadd.f32 %v681, %v682
        %v684 = vsub.f32 0.0, %v683
        %v685 = vld [vmem:[%s596] sm:$0x3]
        %v686 = vld [vmem:[%s596 + $0x2] sm:$0x3]
        %v687 = vld [vmem:[%s596 + $0x4] sm:$0x3]
        %v688 = vld [vmem:[%s504] sm:$0x3]
        %v689 = vld [vmem:[%s504 + $0x2] sm:$0x3]
        %v690 = vld [vmem:[%s504 + $0x4] sm:$0x3]
        %v691 = vld [vmem:[%s513] sm:$0x3]
        %v692 = vld [vmem:[%s513 + $0x2] sm:$0x3]
        %v693 = vld [vmem:[%s513 + $0x4] sm:$0x3]
        %v694 = vld [vmem:[%s513 + $0x6] sm:$0x3]
        %v695 = vld [vmem:[%s513 + $0x8] sm:$0x3]
        %v696 = vld [vmem:[%s513 + $0xa] sm:$0x3]
        %v697 = vmul.f32 %v685, %v691
        %v698 = vmul.f32 %v686, %v692
        %v699 = vadd.f32 %v697, %v698
        %v700 = vmul.f32 %v687, %v693
        %v701 = vadd.f32 %v699, %v700
        %v702 = vmul.f32 %v701, %v644
        %v703 = vand.u32 2147483647, %v702
        %v704 = vsel %vm628, %v703, 0.0
        %v705 = vrot.slane %v704, 4
        %v706 = vadd.f32 %v704, %v705
        %v707 = vrot.slane %v706, 2
        %v708 = vadd.f32 %v706, %v707
        %v709 = vrot.slane %v708, 1
        %v710 = vadd.f32 %v708, %v709
        %v711 = vsub.f32 0.0, %v710
        %v712 = vmul.f32 %v688, %v694
        %v713 = vmul.f32 %v689, %v695
        %v714 = vadd.f32 %v712, %v713
        %v715 = vmul.f32 %v690, %v696
        %v716 = vadd.f32 %v714, %v715
        %v717 = vmul.f32 %v716, %v646
        %v718 = vand.u32 2147483647, %v717
        %v719 = vsel %vm628, %v718, 0.0
        %v720 = vrot.slane %v719, 4
        %v721 = vadd.f32 %v719, %v720
        %v722 = vrot.slane %v721, 2
        %v723 = vadd.f32 %v721, %v722
        %v724 = vrot.slane %v723, 1
        %v725 = vadd.f32 %v723, %v724
        %v726 = vsub.f32 0.0, %v725
        %v727 = vmul.f32 %v685, %v688
        %v728 = vmul.f32 %v686, %v689
        %v729 = vadd.f32 %v727, %v728
        %v730 = vmul.f32 %v687, %v690
        %v731 = vadd.f32 %v729, %v730
        %v732 = vmul.f32 %v731, %v646
        %v733 = vand.u32 2147483647, %v732
        %v734 = vsel %vm628, %v733, 0.0
        %v735 = vrot.slane %v734, 4
        %v736 = vadd.f32 %v734, %v735
        %v737 = vrot.slane %v736, 2
        %v738 = vadd.f32 %v736, %v737
        %v739 = vrot.slane %v738, 1
        %v740 = vadd.f32 %v738, %v739
        %741 = vst [vmem:[%s611] sm:$0x1] %v641
        %742 = vst [vmem:[%s611 + $0x1] sm:$0x1] %v665
        %743 = vst [vmem:[%s611 + $0x2] sm:$0x1] %v684
        %744 = vst [vmem:[%s611 + $0x3] sm:$0x1] %v711
        %745 = vst [vmem:[%s611 + $0x4] sm:$0x1] %v726
        %746 = vst [vmem:[%s611 + $0x5] sm:$0x1] %v740
        %p747 = scmp.lt.s32.totalorder %s35, 1
        %s748 = scalar_select %p747, %s35, 1
        %p749 = scmp.lt.s32.totalorder %s36, 0
        %s750 = scalar_select %p749, %s36, 0
        %s751 = sadd.s32 %s750, %s748
        %s752 = smul.addr %s751, 8
        %s753 = scalar_lea.vmem %s8, %s752
        // Predicated region
        $region77: #{tpu_custom_call.1} parent=51 // pred_check
          %p754 = pneg %p287
        $region78: #{tpu_custom_call.1} parent=51 // pred_check_branch
          %756 = sbr.rel (%p754) target = $region80
        $region79: #{tpu_custom_call.1} parent=51 // pred_region
          _
        $region80: #{tpu_custom_call.1} parent=51 // pred_fallthru
          _
      $region52: #{tpu_custom_call.1} parent=5 // pred_fallthru
        _
      %p757 = scmp.le.s32.totalorder 2, %s26
      // Predicated region
      $region81: #{tpu_custom_call.1} parent=5 // pred_check
        %p758 = pneg %p757
      $region82: #{tpu_custom_call.1} parent=5 // pred_check_branch
        %760 = sbr.rel (%p758) target = $region84
      $region83: #{tpu_custom_call.1} parent=5 // pred_region
        %s761 = ssub.s32 %s26, 2
        // Predicated region
        $region85: #{tpu_custom_call.1} parent=83 // pred_check
          %p762 = pneg %p293
        $region86: #{tpu_custom_call.1} parent=83 // pred_check_branch
          %764 = sbr.rel (%p762) target = $region88
        $region87: #{tpu_custom_call.1} parent=83 // pred_region
          %p765 = scmp.lt.s32.totalorder %s37, 1
          %s766 = scalar_select %p765, %s37, 1
          %p767 = scmp.lt.s32.totalorder %s38, 0
          %s768 = scalar_select %p767, %s38, 0
          %s769 = sadd.s32 %s768, %s766
          %s770 = smul.addr %s769, 8
          %s771 = scalar_lea.vmem %s8, %s770
        $region88: #{tpu_custom_call.1} parent=83 // pred_fallthru
          _
      $region84: #{tpu_custom_call.1} parent=5 // pred_fallthru
        _
    $region6: #{tpu_custom_call.1} parent=1 // loop_footer
      %s30 = sadd.s32 1, %s26
    $region7: #{tpu_custom_call.1} parent=1 // loop_footer_branch
      %25 = sbr.rel target = $region3
    $region8: #{tpu_custom_call.1} parent=1 // loop_exit
      _
    %772 = vsyncpa [#allocation3], 1
    %s773 = scalar_lea.sflag [#allocation3], 1
    %774 = vsyncpa %s773, 1
    %775 = vsyncpa [#allocation5], 1
    %s776 = scalar_lea.sflag [#allocation5], 1
    %777 = vsyncpa %s776, 1
    %778 = vsyncpa [#allocation8], 1
    %s779 = scalar_lea.sflag [#allocation8], 1
    %780 = vsyncpa %s779, 1
    %781 = vsyncpa [#allocation11], 1
    %s782 = scalar_lea.sflag [#allocation11], 1
    %783 = vsyncpa %s782, 1

</llo_original>
